<compile_context>
chip_gen: v7x
topology: tpu7x:2x2x1
jax: 0.10.0
libtpu: 0.0.40
codegen_flags: <defaults>
</compile_context>

<pallas_src>
import math

import jax
import jax.numpy as jnp
from jax import lax
from jax.experimental import pallas as pl
from jax.experimental.pallas import tpu as pltpu


def _make_ce_focal_kernel(alpha, n_valid, tile_n):
    alpha = float(alpha)

    def kernel(p1_ref, p2_ref, tgt_ref, loss_ref, cnt_ref):
        i = pl.program_id(1)

        # Validity of each lane of this tile (ragged tail), computed in-kernel.
        col = i * tile_n + lax.broadcasted_iota(jnp.int32, (1, tile_n), 1)
        valid = col < n_valid                                   # (1, TN) bool

        # Target streamed in native dtype; cheap per-tile cast (no wrapper astype
        # => no extra HBM pass over the label volume).
        tgt = tgt_ref[...].astype(jnp.int32)                    # (1, TN) int32

        def stage(p_raw):
            # Per-tile upcast only (inputs may be bf16).  No per-element validity
            # mask here: every op below is lane-local, and the single final
            # jnp.where on contrib keeps garbage from the padded last tile out
            # of the result (select does not propagate NaN/Inf).
            p = p_raw.astype(jnp.float32)                          # (C, TN)
            m = jnp.max(p, axis=0, keepdims=True)                  # (1, TN)
            e = jnp.exp(p - m)
            s = jnp.sum(e, axis=0, keepdims=True)                  # (1, TN)
            lse = m + jnp.log(s)                                   # logsumexp_c
            # Gather the target-class logit via iota-compare + sublane reduce
            # (C=14 -> a one-hot MXU matmul would be badly underutilized).
            ci = lax.broadcasted_iota(jnp.int32, p.shape, 0)
            sel = jnp.sum(jnp.where(ci == tgt, p, 0.0),
                          axis=0, keepdims=True)                   # (1, TN)
            ce = lse - sel                                         # per-voxel CE
            # max softmax prob = exp(m - lse) = 1/s ; EUP reciprocal, VALU-free.
            max_prob = pl.reciprocal(s, approx=True)
            x = jnp.maximum(1.0 - max_prob, 0.0)
            if alpha == 2.0:
                expo = x * x                                       # no pow on EUP
            elif alpha == 1.0:
                expo = x
            else:
                expo = x ** alpha
            return ce * expo

        contrib = stage(p1_ref[...]) + stage(p2_ref[...])
        contrib = jnp.where(valid, contrib, 0.0)

        # Per-(batch, tile) partial sums: one cross-lane reduce + scalar store per
        # step.  No carried state -> both grid axes can be "parallel".
        loss_ref[...] = jnp.sum(contrib).reshape(1, 1)
        cnt = jnp.where(jnp.logical_and(valid, tgt > 0), 1.0, 0.0)
        cnt_ref[...] = jnp.sum(cnt).reshape(1, 1)

    return kernel


def _round_up(x, m):
    return (x + m - 1) // m * m


def ce_loss(pred_stage1, pred_stage2, target, alpha=2.0, tile_n=32768):
    """pred_stage*: (B, C, D, H, W); target: (B, D, H, W) integer class ids."""
    B, C = pred_stage1.shape[:2]
    spatial = pred_stage1.shape[2:]
    N = int(math.prod(spatial))

    # Free views of the original contiguous layout — no transpose, no pad,
    # no dtype widening in the wrapper (target cast happens per-tile in-kernel).
    p1 = pred_stage1.reshape(B, C, N)
    p2 = pred_stage2.reshape(B, C, N)
    tgt = target.reshape(B, 1, N)

    # Large lane-dense tiles amortize the ~0.35 us per-grid-step cost; cap at
    # 65536 so the double-buffered working set stays inside v7x's 64 MiB VMEM
    # (32 MiB default scoped) without raising vmem_limit_bytes.
    tile_n = int(min(tile_n, 65536))
    tile_n = int(min(tile_n, _round_up(N, 128)))
    n_tiles = pl.cdiv(N, tile_n)

    kernel = _make_ce_focal_kernel(alpha, N, tile_n)

    loss_b, cnt_b = pl.pallas_call(
        kernel,
        out_shape=(jax.ShapeDtypeStruct((B, n_tiles, 1, 1), jnp.float32),
                   jax.ShapeDtypeStruct((B, n_tiles, 1, 1), jnp.float32)),
        grid_spec=pltpu.PrefetchScalarGridSpec(
            num_scalar_prefetch=0,
            grid=(B, n_tiles),
            in_specs=[
                pl.BlockSpec((pl.Squeezed(), C, tile_n), lambda b, i: (b, 0, i)),
                pl.BlockSpec((pl.Squeezed(), C, tile_n), lambda b, i: (b, 0, i)),
                pl.BlockSpec((pl.Squeezed(), 1, tile_n), lambda b, i: (b, 0, i)),
            ],
            out_specs=[
                pl.BlockSpec((pl.Squeezed(), pl.Squeezed(), 1, 1),
                             lambda b, i: (b, i, 0, 0)),
                pl.BlockSpec((pl.Squeezed(), pl.Squeezed(), 1, 1),
                             lambda b, i: (b, i, 0, 0)),
            ],
        ),
        compiler_params=pltpu.CompilerParams(
            dimension_semantics=("parallel", "parallel")),
    )(p1, p2, tgt)

    # Tiny cross-(batch, tile) reduction + conditional denominator in plain JAX.
    loss_sum = jnp.sum(loss_b)
    num_target = jnp.sum(cnt_b)
    # num_target == 0  -> mean over all voxels; else sum / num_target.
    denom = jnp.where(num_target == 0, jnp.float32(B * N), num_target)
    return loss_sum / denom


def _reference(p1, p2, t, alpha=2.0):
    """Pure-JAX reference of the PyTorch module, for a sanity check."""
    B, C = p1.shape[:2]
    p1f = p1.reshape(B, C, -1).astype(jnp.float32)
    p2f = p2.reshape(B, C, -1).astype(jnp.float32)
    tf = t.reshape(B, -1)

    def ce(p):
        lse = jax.scipy.special.logsumexp(p, axis=1)                      # (B, N)
        sel = jnp.take_along_axis(p, tf[:, None, :], axis=1)[:, 0, :]     # (B, N)
        return lse - sel

    def expo(p):
        return (1.0 - jax.nn.softmax(p, axis=1).max(axis=1)) ** alpha

    loss = ce(p1f) * expo(p1f) + ce(p2f) * expo(p2f)
    nt = (tf > 0).astype(jnp.float32).sum()
    return jnp.where(nt == 0, loss.mean(), loss.sum() / nt)


if __name__ == "__main__":
    # Small shapes consistent with the module: (B, 14, D, H, W) preds, (B, D, H, W) labels.
    B, C, D, H, W = 2, 14, 4, 16, 16
    key = jax.random.PRNGKey(0)
    k1, k2, k3 = jax.random.split(key, 3)
    pred_stage1 = jax.random.normal(k1, (B, C, D, H, W), dtype=jnp.float32)
    pred_stage2 = jax.random.normal(k2, (B, C, D, H, W), dtype=jnp.float32)
    target = jax.random.randint(k3, (B, D, H, W), 0, C, dtype=jnp.int32)

    out = ce_loss(pred_stage1, pred_stage2, target, alpha=2.0)
    out = jax.block_until_ready(out)

    ref = _reference(pred_stage1, pred_stage2, target, alpha=2.0)
    # Slightly relaxed tolerance: approx EUP reciprocal in the focal weight.
    assert jnp.allclose(out, ref, rtol=5e-3, atol=1e-3), (out, ref)

    print("KERNEL_OK")
</pallas_src>

<mosaic_0001>
module attributes {stable_mosaic.version = 11 : i64} {
  func.func @kernel(%arg0: i32, %arg1: i32, %arg2: memref<1x14x1024xf32, #tpu.memory_space<vmem>>, %arg3: memref<1x14x1024xf32, #tpu.memory_space<vmem>>, %arg4: memref<1x1x1024xi32, #tpu.memory_space<vmem>>, %arg5: memref<1x1x1x1xf32, #tpu.memory_space<vmem>>, %arg6: memref<1x1x1x1xf32, #tpu.memory_space<vmem>>) attributes {dimension_semantics = [#tpu.dimension_semantics<parallel>, #tpu.dimension_semantics<parallel>], iteration_bounds = array<i64: 2, 1>, scalar_prefetch = 0 : i64, scratch_operands = 0 : i64, tpu.core_type = #tpu.core_type<tc>, window_params = [{transform_indices = @transform_0, window_bounds = array<i64: 1, 14, 1024>}, {transform_indices = @transform_1, window_bounds = array<i64: 1, 14, 1024>}, {transform_indices = @transform_2, window_bounds = array<i64: 1, 1, 1024>}, {transform_indices = @transform_3, window_bounds = array<i64: 1, 1, 1, 1>}, {transform_indices = @transform_4, window_bounds = array<i64: 1, 1, 1, 1>}]} {
    %c1024_i32 = arith.constant 1024 : i32
    %0 = arith.muli %arg1, %c1024_i32 : i32
    %1 = tpu.iota {dimensions = array<i32: 1>} : vector<1x1024xi32>
    %2 = vector.broadcast %0 : i32 to vector<1x1024xi32>
    %3 = arith.addi %2, %1 : vector<1x1024xi32>
    %c1024_i32_0 = arith.constant 1024 : i32
    %4 = vector.broadcast %c1024_i32_0 : i32 to vector<1x1024xi32>
    %5 = arith.cmpi slt, %3, %4 : vector<1x1024xi32>
    %c0 = arith.constant 0 : index
    %c0_1 = arith.constant 0 : index
    %c0_2 = arith.constant 0 : index
    %6 = vector.load %arg4[%c0, %c0_1, %c0_2] : memref<1x1x1024xi32, #tpu.memory_space<vmem>>, vector<1x1x1024xi32>
    %7 = vector.shape_cast %6 : vector<1x1x1024xi32> to vector<1x1024xi32>
    %c0_3 = arith.constant 0 : index
    %c0_4 = arith.constant 0 : index
    %c0_5 = arith.constant 0 : index
    %8 = vector.load %arg2[%c0_3, %c0_4, %c0_5] : memref<1x14x1024xf32, #tpu.memory_space<vmem>>, vector<1x14x1024xf32>
    %9 = vector.shape_cast %8 : vector<1x14x1024xf32> to vector<14x1024xf32>
    %cst = arith.constant dense<0xFF800000> : vector<1024xf32>
    %10 = vector.multi_reduction <maximumf>, %9, %cst [0] : vector<14x1024xf32> to vector<1024xf32>
    %11 = vector.shape_cast %10 : vector<1024xf32> to vector<1x1024xf32>
    %12 = vector.broadcast %11 : vector<1x1024xf32> to vector<14x1024xf32>
    %13 = arith.subf %9, %12 : vector<14x1024xf32>
    %14 = math.exp %13 : vector<14x1024xf32>
    %cst_6 = arith.constant dense<0.000000e+00> : vector<1024xf32>
    %15 = vector.multi_reduction <add>, %14, %cst_6 [0] : vector<14x1024xf32> to vector<1024xf32>
    %16 = vector.shape_cast %15 : vector<1024xf32> to vector<1x1024xf32>
    %17 = math.log %16 : vector<1x1024xf32>
    %18 = arith.addf %11, %17 : vector<1x1024xf32>
    %19 = tpu.iota {dimensions = array<i32: 0>} : vector<14x1024xi32>
    %20 = vector.broadcast %7 : vector<1x1024xi32> to vector<14x1024xi32>
    %21 = arith.cmpi eq, %19, %20 : vector<14x1024xi32>
    %cst_7 = arith.constant 0.000000e+00 : f32
    %22 = vector.broadcast %cst_7 : f32 to vector<14x1024xf32>
    %23 = arith.select %21, %9, %22 : vector<14x1024xi1>, vector<14x1024xf32>
    %cst_8 = arith.constant dense<0.000000e+00> : vector<1024xf32>
    %24 = vector.multi_reduction <add>, %23, %cst_8 [0] : vector<14x1024xf32> to vector<1024xf32>
    %25 = vector.shape_cast %24 : vector<1024xf32> to vector<1x1024xf32>
    %26 = arith.subf %18, %25 : vector<1x1024xf32>
    %27 = tpu.reciprocal %16 {approx = true} : vector<1x1024xf32> -> vector<1x1024xf32>
    %cst_9 = arith.constant 1.000000e+00 : f32
    %28 = vector.broadcast %cst_9 : f32 to vector<1x1024xf32>
    %29 = arith.subf %28, %27 : vector<1x1024xf32>
    %cst_10 = arith.constant 0.000000e+00 : f32
    %30 = vector.broadcast %cst_10 : f32 to vector<1x1024xf32>
    %31 = arith.maximumf %29, %30 : vector<1x1024xf32>
    %32 = arith.mulf %31, %31 : vector<1x1024xf32>
    %33 = arith.mulf %26, %32 : vector<1x1024xf32>
    %c0_11 = arith.constant 0 : index
    %c0_12 = arith.constant 0 : index
    %c0_13 = arith.constant 0 : index
    %34 = vector.load %arg3[%c0_11, %c0_12, %c0_13] : memref<1x14x1024xf32, #tpu.memory_space<vmem>>, vector<1x14x1024xf32>
    %35 = vector.shape_cast %34 : vector<1x14x1024xf32> to vector<14x1024xf32>
    %cst_14 = arith.constant dense<0xFF800000> : vector<1024xf32>
    %36 = vector.multi_reduction <maximumf>, %35, %cst_14 [0] : vector<14x1024xf32> to vector<1024xf32>
    %37 = vector.shape_cast %36 : vector<1024xf32> to vector<1x1024xf32>
    %38 = vector.broadcast %37 : vector<1x1024xf32> to vector<14x1024xf32>
    %39 = arith.subf %35, %38 : vector<14x1024xf32>
    %40 = math.exp %39 : vector<14x1024xf32>
    %cst_15 = arith.constant dense<0.000000e+00> : vector<1024xf32>
    %41 = vector.multi_reduction <add>, %40, %cst_15 [0] : vector<14x1024xf32> to vector<1024xf32>
    %42 = vector.shape_cast %41 : vector<1024xf32> to vector<1x1024xf32>
    %43 = math.log %42 : vector<1x1024xf32>
    %44 = arith.addf %37, %43 : vector<1x1024xf32>
    %45 = tpu.iota {dimensions = array<i32: 0>} : vector<14x1024xi32>
    %46 = vector.broadcast %7 : vector<1x1024xi32> to vector<14x1024xi32>
    %47 = arith.cmpi eq, %45, %46 : vector<14x1024xi32>
    %cst_16 = arith.constant 0.000000e+00 : f32
    %48 = vector.broadcast %cst_16 : f32 to vector<14x1024xf32>
    %49 = arith.select %47, %35, %48 : vector<14x1024xi1>, vector<14x1024xf32>
    %cst_17 = arith.constant dense<0.000000e+00> : vector<1024xf32>
    %50 = vector.multi_reduction <add>, %49, %cst_17 [0] : vector<14x1024xf32> to vector<1024xf32>
    %51 = vector.shape_cast %50 : vector<1024xf32> to vector<1x1024xf32>
    %52 = arith.subf %44, %51 : vector<1x1024xf32>
    %53 = tpu.reciprocal %42 {approx = true} : vector<1x1024xf32> -> vector<1x1024xf32>
    %cst_18 = arith.constant 1.000000e+00 : f32
    %54 = vector.broadcast %cst_18 : f32 to vector<1x1024xf32>
    %55 = arith.subf %54, %53 : vector<1x1024xf32>
    %cst_19 = arith.constant 0.000000e+00 : f32
    %56 = vector.broadcast %cst_19 : f32 to vector<1x1024xf32>
    %57 = arith.maximumf %55, %56 : vector<1x1024xf32>
    %58 = arith.mulf %57, %57 : vector<1x1024xf32>
    %59 = arith.mulf %52, %58 : vector<1x1024xf32>
    %60 = arith.addf %33, %59 : vector<1x1024xf32>
    %cst_20 = arith.constant 0.000000e+00 : f32
    %61 = vector.broadcast %cst_20 : f32 to vector<1x1024xf32>
    %62 = arith.select %5, %60, %61 : vector<1x1024xi1>, vector<1x1024xf32>
    %63 = vector.shape_cast %62 : vector<1x1024xf32> to vector<1x1x1024xf32>
    %cst_21 = arith.constant dense<0.000000e+00> : vector<1xf32>
    %64 = vector.multi_reduction <add>, %63, %cst_21 [1, 2] : vector<1x1x1024xf32> to vector<1xf32>
    %65 = vector.shape_cast %64 : vector<1xf32> to vector<1x1x1xf32>
    %66 = vector.extract %65[0, 0, 0] : f32 from vector<1x1x1xf32>
    %67 = vector.broadcast %66 : f32 to vector<1x1xf32>
    %c0_22 = arith.constant 0 : index
    %c0_23 = arith.constant 0 : index
    %c0_24 = arith.constant 0 : index
    %c0_25 = arith.constant 0 : index
    %68 = vector.load %arg5[%c0_22, %c0_23, %c0_24, %c0_25] : memref<1x1x1x1xf32, #tpu.memory_space<vmem>>, vector<1x1x1x1xf32>
    %69 = vector.shape_cast %68 : vector<1x1x1x1xf32> to vector<1x1xf32>
    %70 = vector.shape_cast %67 : vector<1x1xf32> to vector<1x1x1x1xf32>
    tpu.vector_store %arg5[%c0_22, %c0_23, %c0_24, %c0_25], %70 {strides = array<i32>} : memref<1x1x1x1xf32, #tpu.memory_space<vmem>>, vector<1x1x1x1xf32>,
    %c0_i32 = arith.constant 0 : i32
    %71 = vector.broadcast %c0_i32 : i32 to vector<1x1024xi32>
    %72 = arith.cmpi sgt, %7, %71 : vector<1x1024xi32>
    %73 = arith.andi %5, %72 : vector<1x1024xi1>
    %cst_26 = arith.constant 1.000000e+00 : f32
    %cst_27 = arith.constant 0.000000e+00 : f32
    %74 = vector.broadcast %cst_26 : f32 to vector<1x1024xf32>
    %75 = vector.broadcast %cst_27 : f32 to vector<1x1024xf32>
    %76 = arith.select %73, %74, %75 : vector<1x1024xi1>, vector<1x1024xf32>
    %77 = vector.shape_cast %76 : vector<1x1024xf32> to vector<1x1x1024xf32>
    %cst_28 = arith.constant dense<0.000000e+00> : vector<1xf32>
    %78 = vector.multi_reduction <add>, %77, %cst_28 [1, 2] : vector<1x1x1024xf32> to vector<1xf32>
    %79 = vector.shape_cast %78 : vector<1xf32> to vector<1x1x1xf32>
    %80 = vector.extract %79[0, 0, 0] : f32 from vector<1x1x1xf32>
    %81 = vector.broadcast %80 : f32 to vector<1x1xf32>
    %c0_29 = arith.constant 0 : index
    %c0_30 = arith.constant 0 : index
    %c0_31 = arith.constant 0 : index
    %c0_32 = arith.constant 0 : index
    %82 = vector.load %arg6[%c0_29, %c0_30, %c0_31, %c0_32] : memref<1x1x1x1xf32, #tpu.memory_space<vmem>>, vector<1x1x1x1xf32>
    %83 = vector.shape_cast %82 : vector<1x1x1x1xf32> to vector<1x1xf32>
    %84 = vector.shape_cast %81 : vector<1x1xf32> to vector<1x1x1x1xf32>
    tpu.vector_store %arg6[%c0_29, %c0_30, %c0_31, %c0_32], %84 {strides = array<i32>} : memref<1x1x1x1xf32, #tpu.memory_space<vmem>>, vector<1x1x1x1xf32>,
    return
  }
  func.func @transform_0(%arg0: i32, %arg1: i32) -> (i32, i32, i32) {
    %c0_i32 = arith.constant 0 : i32
    %c0_i32_0 = arith.constant 0 : i32
    return %arg0, %c0_i32, %arg1 : i32, i32, i32
  }
  func.func @transform_1(%arg0: i32, %arg1: i32) -> (i32, i32, i32) {
    %c0_i32 = arith.constant 0 : i32
    %c0_i32_0 = arith.constant 0 : i32
    return %arg0, %c0_i32, %arg1 : i32, i32, i32
  }
  func.func @transform_2(%arg0: i32, %arg1: i32) -> (i32, i32, i32) {
    %c0_i32 = arith.constant 0 : i32
    %c0_i32_0 = arith.constant 0 : i32
    return %arg0, %c0_i32, %arg1 : i32, i32, i32
  }
  func.func @transform_3(%arg0: i32, %arg1: i32) -> (i32, i32, i32, i32) {
    %c0_i32 = arith.constant 0 : i32
    %c0_i32_0 = arith.constant 0 : i32
    %c0_i32_1 = arith.constant 0 : i32
    return %arg0, %arg1, %c0_i32, %c0_i32_0 : i32, i32, i32, i32
  }
  func.func @transform_4(%arg0: i32, %arg1: i32) -> (i32, i32, i32, i32) {
    %c0_i32 = arith.constant 0 : i32
    %c0_i32_0 = arith.constant 0 : i32
    %c0_i32_1 = arith.constant 0 : i32
    return %arg0, %arg1, %c0_i32, %c0_i32_0 : i32, i32, i32, i32
  }
}

</mosaic_0001>

<llo_original>
// kernel: tpu_custom_call.1
$region0: #{tpu_custom_call.1}
  #allocation0 [shape = 'u32[]', space=smem, size = 0x4, offset = 0x4, fixed_abs, tag = 'smem constant byte address 0x4 - core index']
  #allocation1 [shape = 'u32[144,128]{1,0:T(1,128)}', space=vmem, size = 0x12000, scoped, tag = 'internal scratch']
  %s0 = inlined_call_operand.vmem [shape: f32[2,14,1024], index: 0, kind: input, shape index: {}]
  %s1 = inlined_call_operand.vmem [shape: f32[2,14,1024], index: 1, kind: input, shape index: {}]
  %s2 = inlined_call_operand.vmem [shape: s32[2,1,1024], index: 2, kind: input, shape index: {}]
  %s3 = inlined_call_operand.vmem [shape: f32[2,1,1,1], index: 3, kind: output, shape index: {0}]
  %s4 = inlined_call_operand.vmem [shape: f32[2,1,1,1], index: 4, kind: output, shape index: {1}]
  %5 = xla_tuple %s3, %s4
  %s6 = sld [smem:[#allocation0]]
  $region53: #{tpu_custom_call.1} parent=0
    _
  %s8 = ssub.s32 1, %s6
  %s9 = scalar_select 0, %s8, %s6
  loop: start=0, step=1, limit=4
  $region2: #{tpu_custom_call.1} parent=0 // loop_pre_header
    _
  $region3: #{tpu_custom_call.1} parent=0 // loop_header
    %s11 = sphi 0, %s15
    %p12 = scmp.ge.s32.totalorder %s11, 4
    %s18 = sphi 0, %s30
    %s19 = sphi 0, %s26
    %s20 = sphi 0, %s18
    %s21 = sphi 0, %s19
    %s22 = sphi 0, %s20
    %s23 = sphi 0, %s21
    %s35 = sphi 0, %s37
    %s38 = sphi 0, %s35
    %s39 = sphi 0, %s38
    %s55 = sphi 0, %s39
    %s63 = sphi 0, %s65
    %s66 = sphi 0, %s63
    %s67 = sphi 0, %s66
    %s83 = sphi 0, %s67
    %s91 = sphi 0, %s93
    %s94 = sphi 0, %s91
    %s95 = sphi 0, %s94
    %s111 = sphi 0, %s95
    %s119 = sphi 0, %s121
    %s122 = sphi 0, %s119
    %s123 = sphi 0, %s122
    %s139 = sphi 0, %s123
    %s147 = sphi 0, %s149
    %s150 = sphi 0, %s147
    %s151 = sphi 0, %s150
    %s167 = sphi 0, %s151
  $region4: #{tpu_custom_call.1} parent=0 // loop_header_branch
    %14 = sbr.rel (%p12) target = $region8
  $region5: #{tpu_custom_call.1} parent=0 // loop_body
    %s16 = ssub.s32 %s11, 1
    %s17 = ssub.s32 %s11, 2
    %s24 = sadd.s32 1, %s19
    %p25 = scmp.ge.s32.totalorder %s24, 1
    %s26 = scalar_select %p25, 0, %s24
    %s27 = sadd.s32 1, %s18
    %s28 = scalar_select %p25, %s27, %s18
    %p29 = scmp.ge.s32.totalorder %s28, 2
    %s30 = scalar_select %p29, 0, %s28
    %s31 = ssub.s32 %s18, %s30
    %s32 = ssub.s32 %s19, %s26
    %s33 = sor.u32 %s31, %s32
    %p34 = scmp.eq.s32.totalorder %s33, 0
    %s36 = sadd.s32 %s35, 1
    %s37 = scalar_select %p34, %s35, %s36
    %p40 = pneg %p34
    %p41 = scmp.eq.s32.totalorder %s11, 1
    %p42 = por %p40, %p41
    %p43 = scmp.ne.s32.totalorder %s35, %s38
    %p44 = scmp.eq.s32.totalorder %s11, 0
    %p45 = por %p43, %p44
    %p46 = scmp.ne.s32.totalorder %s35, %s38
    %p47 = scmp.eq.s32.totalorder %s16, 1
    %p48 = por %p46, %p47
    %p49 = scmp.ne.s32.totalorder %s38, %s39
    %p50 = scmp.eq.s32.totalorder %s16, 0
    %p51 = por %p49, %p50
    %p52 = scmp.ne.s32.totalorder %s38, %s39
    %p53 = scmp.eq.s32.totalorder %s17, 1
    %p54 = por %p52, %p53
    %p56 = scmp.ne.s32.totalorder %s39, %s55
    %p57 = scmp.eq.s32.totalorder %s17, 0
    %p58 = por %p56, %p57
    %s59 = ssub.s32 %s18, %s30
    %s60 = ssub.s32 %s19, %s26
    %s61 = sor.u32 %s59, %s60
    %p62 = scmp.eq.s32.totalorder %s61, 0
    %s64 = sadd.s32 %s63, 1
    %s65 = scalar_select %p62, %s63, %s64
    %p68 = pneg %p62
    %p69 = scmp.eq.s32.totalorder %s11, 1
    %p70 = por %p68, %p69
    %p71 = scmp.ne.s32.totalorder %s63, %s66
    %p72 = scmp.eq.s32.totalorder %s11, 0
    %p73 = por %p71, %p72
    %p74 = scmp.ne.s32.totalorder %s63, %s66
    %p75 = scmp.eq.s32.totalorder %s16, 1
    %p76 = por %p74, %p75
    %p77 = scmp.ne.s32.totalorder %s66, %s67
    %p78 = scmp.eq.s32.totalorder %s16, 0
    %p79 = por %p77, %p78
    %p80 = scmp.ne.s32.totalorder %s66, %s67
    %p81 = scmp.eq.s32.totalorder %s17, 1
    %p82 = por %p80, %p81
    %p84 = scmp.ne.s32.totalorder %s67, %s83
    %p85 = scmp.eq.s32.totalorder %s17, 0
    %p86 = por %p84, %p85
    %s87 = ssub.s32 %s18, %s30
    %s88 = ssub.s32 %s19, %s26
    %s89 = sor.u32 %s87, %s88
    %p90 = scmp.eq.s32.totalorder %s89, 0
    %s92 = sadd.s32 %s91, 1
    %s93 = scalar_select %p90, %s91, %s92
    %p96 = pneg %p90
    %p97 = scmp.eq.s32.totalorder %s11, 1
    %p98 = por %p96, %p97
    %p99 = scmp.ne.s32.totalorder %s91, %s94
    %p100 = scmp.eq.s32.totalorder %s11, 0
    %p101 = por %p99, %p100
    %p102 = scmp.ne.s32.totalorder %s91, %s94
    %p103 = scmp.eq.s32.totalorder %s16, 1
    %p104 = por %p102, %p103
    %p105 = scmp.ne.s32.totalorder %s94, %s95
    %p106 = scmp.eq.s32.totalorder %s16, 0
    %p107 = por %p105, %p106
    %p108 = scmp.ne.s32.totalorder %s94, %s95
    %p109 = scmp.eq.s32.totalorder %s17, 1
    %p110 = por %p108, %p109
    %p112 = scmp.ne.s32.totalorder %s95, %s111
    %p113 = scmp.eq.s32.totalorder %s17, 0
    %p114 = por %p112, %p113
    %s115 = ssub.s32 %s18, %s30
    %s116 = ssub.s32 %s19, %s26
    %s117 = sor.u32 %s115, %s116
    %p118 = scmp.eq.s32.totalorder %s117, 0
    %s120 = sadd.s32 %s119, 1
    %s121 = scalar_select %p118, %s119, %s120
    %p124 = pneg %p118
    %p125 = scmp.eq.s32.totalorder %s11, 1
    %p126 = por %p124, %p125
    %p127 = scmp.ne.s32.totalorder %s119, %s122
    %p128 = scmp.eq.s32.totalorder %s11, 0
    %p129 = por %p127, %p128
    %p130 = scmp.ne.s32.totalorder %s119, %s122
    %p131 = scmp.eq.s32.totalorder %s16, 1
    %p132 = por %p130, %p131
    %p133 = scmp.ne.s32.totalorder %s122, %s123
    %p134 = scmp.eq.s32.totalorder %s16, 0
    %p135 = por %p133, %p134
    %p136 = scmp.ne.s32.totalorder %s122, %s123
    %p137 = scmp.eq.s32.totalorder %s17, 1
    %p138 = por %p136, %p137
    %p140 = scmp.ne.s32.totalorder %s123, %s139
    %p141 = scmp.eq.s32.totalorder %s17, 0
    %p142 = por %p140, %p141
    %s143 = ssub.s32 %s18, %s30
    %s144 = ssub.s32 %s19, %s26
    %s145 = sor.u32 %s143, %s144
    %p146 = scmp.eq.s32.totalorder %s145, 0
    %s148 = sadd.s32 %s147, 1
    %s149 = scalar_select %p146, %s147, %s148
    %p152 = pneg %p146
    %p153 = scmp.eq.s32.totalorder %s11, 1
    %p154 = por %p152, %p153
    %p155 = scmp.ne.s32.totalorder %s147, %s150
    %p156 = scmp.eq.s32.totalorder %s11, 0
    %p157 = por %p155, %p156
    %p158 = scmp.ne.s32.totalorder %s147, %s150
    %p159 = scmp.eq.s32.totalorder %s16, 1
    %p160 = por %p158, %p159
    %p161 = scmp.ne.s32.totalorder %s150, %s151
    %p162 = scmp.eq.s32.totalorder %s16, 0
    %p163 = por %p161, %p162
    %p164 = scmp.ne.s32.totalorder %s150, %s151
    %p165 = scmp.eq.s32.totalorder %s17, 1
    %p166 = por %p164, %p165
    %p168 = scmp.ne.s32.totalorder %s151, %s167
    %p169 = scmp.eq.s32.totalorder %s17, 0
    %p170 = por %p168, %p169
    %p171 = scmp.le.s32.totalorder 1, %s11
    %p172 = scmp.lt.s32.totalorder %s11, 3
    %p173 = pnand %p171, %p172
    %p174 = pneg %p173
    // Predicated region
    $region9: #{tpu_custom_call.1} parent=5 // pred_check
      _
    $region10: #{tpu_custom_call.1} parent=5 // pred_check_branch
      %176 = sbr.rel (%p173) target = $region12
    $region11: #{tpu_custom_call.1} parent=5 // pred_region
      %s177 = ssub.s32 %s11, 1
    $region12: #{tpu_custom_call.1} parent=5 // pred_fallthru
      _
    %p178 = scmp.lt.s32.totalorder %s11, 2
    // Predicated region
    $region13: #{tpu_custom_call.1} parent=5 // pred_check
      %p179 = pneg %p178
    $region14: #{tpu_custom_call.1} parent=5 // pred_check_branch
      %181 = sbr.rel (%p179) target = $region16
    $region15: #{tpu_custom_call.1} parent=5 // pred_region
      // Predicated region
      $region17: #{tpu_custom_call.1} parent=15 // pred_check
        %p182 = pneg %p45
      $region18: #{tpu_custom_call.1} parent=15 // pred_check_branch
        %184 = sbr.rel (%p182) target = $region20
      $region19: #{tpu_custom_call.1} parent=15 // pred_region
        %s185 = smul.u32 8, %s19
        %p186 = scmp.lt.s32.totalorder %s18, 1
        %s187 = scalar_select %p186, %s18, 1
        %p188 = scmp.lt.s32.totalorder %s185, 7
        %s189 = scalar_select %p188, %s185, 7
        %s190 = smul.addr %s187, 16
        %s191 = sadd.s32 %s189, %s190
        %s192 = smul.addr %s191, 8
        %s193 = scalar_lea.vmem %s0, %s192
        %s194 = smul.u32 8, %s19
      $region20: #{tpu_custom_call.1} parent=15 // pred_fallthru
        _
      // Predicated region
      $region21: #{tpu_custom_call.1} parent=15 // pred_check
        %p195 = pneg %p73
      $region22: #{tpu_custom_call.1} parent=15 // pred_check_branch
        %197 = sbr.rel (%p195) target = $region24
      $region23: #{tpu_custom_call.1} parent=15 // pred_region
        %s198 = smul.u32 8, %s19
        %p199 = scmp.lt.s32.totalorder %s18, 1
        %s200 = scalar_select %p199, %s18, 1
        %p201 = scmp.lt.s32.totalorder %s198, 7
        %s202 = scalar_select %p201, %s198, 7
        %s203 = smul.addr %s200, 16
        %s204 = sadd.s32 %s202, %s203
        %s205 = smul.addr %s204, 8
        %s206 = scalar_lea.vmem %s1, %s205
        %s207 = smul.u32 8, %s19
      $region24: #{tpu_custom_call.1} parent=15 // pred_fallthru
        _
      // Predicated region
      $region25: #{tpu_custom_call.1} parent=15 // pred_check
        %p208 = pneg %p101
      $region26: #{tpu_custom_call.1} parent=15 // pred_check_branch
        %210 = sbr.rel (%p208) target = $region28
      $region27: #{tpu_custom_call.1} parent=15 // pred_region
        %s211 = smul.u32 8, %s19
        %p212 = scmp.lt.s32.totalorder %s18, 1
        %s213 = scalar_select %p212, %s18, 1
        %p214 = scmp.lt.s32.totalorder %s211, 7
        %s215 = scalar_select %p214, %s211, 7
        %s216 = smul.addr %s213, 8
        %s217 = sadd.s32 %s215, %s216
        %s218 = scalar_lea.vmem %s2, %s217
        %s219 = smul.u32 8, %s19
      $region28: #{tpu_custom_call.1} parent=15 // pred_fallthru
        _
    $region16: #{tpu_custom_call.1} parent=5 // pred_fallthru
      _
    %p220 = scmp.le.s32.totalorder 1, %s11
    %p221 = scmp.lt.s32.totalorder %s11, 3
    %p222 = pnand %p220, %p221
    %p223 = pneg %p222
    // Predicated region
    $region29: #{tpu_custom_call.1} parent=5 // pred_check
      _
    $region30: #{tpu_custom_call.1} parent=5 // pred_check_branch
      %225 = sbr.rel (%p222) target = $region32
    $region31: #{tpu_custom_call.1} parent=5 // pred_region
      %s226 = ssub.s32 %s11, 1
      %s227 = smul.u32 8, %s21
      %p228 = scmp.lt.s32.totalorder %s20, 1
      %s229 = scalar_select %p228, %s20, 1
      %p230 = scmp.lt.s32.totalorder %s227, 7
      %s231 = scalar_select %p230, %s227, 7
      %s232 = smul.addr %s229, 16
      %s233 = sadd.s32 %s231, %s232
      %s234 = smul.addr %s233, 8
      %s235 = scalar_lea.vmem %s0, %s234
      %p236 = pneg %p51
      %p237 = pneg %p48
      %s238 = smul.u32 8, %s21
      %p239 = scmp.lt.s32.totalorder %s20, 1
      %s240 = scalar_select %p239, %s20, 1
      %p241 = scmp.lt.s32.totalorder %s238, 7
      %s242 = scalar_select %p241, %s238, 7
      %s243 = smul.addr %s240, 16
      %s244 = sadd.s32 %s242, %s243
      %s245 = smul.addr %s244, 8
      %s246 = scalar_lea.vmem %s1, %s245
      %p247 = pneg %p79
      %p248 = pneg %p76
      %s249 = smul.u32 8, %s21
      %p250 = scmp.lt.s32.totalorder %s20, 1
      %s251 = scalar_select %p250, %s20, 1
      %p252 = scmp.lt.s32.totalorder %s249, 7
      %s253 = scalar_select %p252, %s249, 7
      %s254 = smul.addr %s251, 8
      %s255 = sadd.s32 %s253, %s254
      %s256 = scalar_lea.vmem %s2, %s255
      %p257 = pneg %p107
      %p258 = pneg %p104
      %p259 = pneg %p135
      %p260 = pneg %p132
      %p261 = scmp.lt.s32.totalorder %s20, 1
      %s262 = scalar_select %p261, %s20, 1
      %p263 = scmp.lt.s32.totalorder %s21, 0
      %s264 = scalar_select %p263, %s21, 0
      %s265 = sadd.s32 %s264, %s262
      %s266 = scalar_lea.vmem %s3, %s265
      %p267 = pneg %p163
      %p268 = pneg %p160
      %p269 = scmp.lt.s32.totalorder %s20, 1
      %s270 = scalar_select %p269, %s20, 1
      %p271 = scmp.lt.s32.totalorder %s21, 0
      %s272 = scalar_select %p271, %s21, 0
      %s273 = sadd.s32 %s272, %s270
      %s274 = scalar_lea.vmem %s4, %s273
      %s275 = smul.u32 8, %s21
      %p276 = scmp.lt.s32.totalorder %s20, 1
      %s277 = scalar_select %p276, %s20, 1
      %p278 = scmp.lt.s32.totalorder %s275, 7
      %s279 = scalar_select %p278, %s275, 7
      %s280 = smul.addr %s277, 16
      %s281 = sadd.s32 %s279, %s280
      %s282 = smul.addr %s281, 8
      %s283 = scalar_lea.vmem %s0, %s282
      %s284 = smul.u32 8, %s21
      %s285 = smul.u32 8, %s21
      %p286 = scmp.lt.s32.totalorder %s20, 1
      %s287 = scalar_select %p286, %s20, 1
      %p288 = scmp.lt.s32.totalorder %s285, 7
      %s289 = scalar_select %p288, %s285, 7
      %s290 = smul.addr %s287, 16
      %s291 = sadd.s32 %s289, %s290
      %s292 = smul.addr %s291, 8
      %s293 = scalar_lea.vmem %s1, %s292
      %s294 = smul.u32 8, %s21
      %s295 = smul.u32 8, %s21
      %p296 = scmp.lt.s32.totalorder %s20, 1
      %s297 = scalar_select %p296, %s20, 1
      %p298 = scmp.lt.s32.totalorder %s295, 7
      %s299 = scalar_select %p298, %s295, 7
      %s300 = smul.addr %s297, 8
      %s301 = sadd.s32 %s299, %s300
      %s302 = scalar_lea.vmem %s2, %s301
      %s303 = smul.u32 8, %s21
      %p304 = scmp.lt.s32.totalorder %s20, 1
      %s305 = scalar_select %p304, %s20, 1
      %p306 = scmp.lt.s32.totalorder %s21, 0
      %s307 = scalar_select %p306, %s21, 0
      %s308 = sadd.s32 %s307, %s305
      %s309 = scalar_lea.vmem %s3, %s308
      %p310 = scmp.lt.s32.totalorder %s20, 1
      %s311 = scalar_select %p310, %s20, 1
      %p312 = scmp.lt.s32.totalorder %s21, 0
      %s313 = scalar_select %p312, %s21, 0
      %s314 = sadd.s32 %s313, %s311
      %s315 = scalar_lea.vmem %s4, %s314
      %s316 = smul.u32 %s21, 1024
      %v317 = vlaneseq
      %v318 = vand.u32 %v317, 127
      %v319 = vadd.s32 %v318, 128
      %v320 = vadd.s32 %v318, 256
      %v321 = vadd.s32 %v318, 384
      %v322 = vadd.s32 %v318, 512
      %v323 = vadd.s32 %v318, 640
      %v324 = vadd.s32 %v318, 768
      %v325 = vadd.s32 %v318, 896
      %v326 = vstv %s316
      %v327 = vadd.s32 %v326, %v318
      %v328 = vadd.s32 %v326, %v319
      %v329 = vadd.s32 %v326, %v320
      %v330 = vadd.s32 %v326, %v321
      %v331 = vadd.s32 %v326, %v322
      %v332 = vadd.s32 %v326, %v323
      %v333 = vadd.s32 %v326, %v324
      %v334 = vadd.s32 %v326, %v325
      %vm335 = vcmp.lt.s32.totalorder %v327, 1024
      %vm336 = vcmp.lt.s32.totalorder %v328, 1024
      %vm337 = vcmp.lt.s32.totalorder %v329, 1024
      %vm338 = vcmp.lt.s32.totalorder %v330, 1024
      %vm339 = vcmp.lt.s32.totalorder %v331, 1024
      %vm340 = vcmp.lt.s32.totalorder %v332, 1024
      %vm341 = vcmp.lt.s32.totalorder %v333, 1024
      %vm342 = vcmp.lt.s32.totalorder %v334, 1024
      %v343 = vld [vmem:[%s302] sm:$0xff]
      %v344 = vld [vmem:[%s283] sm:$0xff]
      %v345 = vld [vmem:[%s283 + $0x8] sm:$0xff]
      %v346 = vld [vmem:[%s283 + $0x10] sm:$0xff]
      %v347 = vld [vmem:[%s283 + $0x18] sm:$0xff]
      %v348 = vld [vmem:[%s283 + $0x20] sm:$0xff]
      %v349 = vld [vmem:[%s283 + $0x28] sm:$0xff]
      %v350 = vld [vmem:[%s283 + $0x30] sm:$0xff]
      %v351 = vld [vmem:[%s283 + $0x38] sm:$0xff]
      %v352 = vld [vmem:[%s283 + $0x40] sm:$0x3f]
      %v353 = vld [vmem:[%s283 + $0x48] sm:$0x3f]
      %v354 = vld [vmem:[%s283 + $0x50] sm:$0x3f]
      %v355 = vld [vmem:[%s283 + $0x58] sm:$0x3f]
      %v356 = vld [vmem:[%s283 + $0x60] sm:$0x3f]
      %v357 = vld [vmem:[%s283 + $0x68] sm:$0x3f]
      %v358 = vld [vmem:[%s283 + $0x70] sm:$0x3f]
      %v359 = vld [vmem:[%s283 + $0x78] sm:$0x3f]
      %vm360 = vcmask 1045504
      %v361 = vsel %vm360, %v352, -inf
      %v362 = vmax.f32 %v344, %v361
      %v363 = vrot.slane %v362, 4
      %v364 = vmax.f32 %v362, %v363
      %v365 = vrot.slane %v364, 2
      %v366 = vmax.f32 %v364, %v365
      %v367 = vrot.slane %v366, 1
      %v368 = vmax.f32 %v366, %v367
      %v369 = vsel %vm360, %v353, -inf
      %v370 = vmax.f32 %v345, %v369
      %v371 = vrot.slane %v370, 4
      %v372 = vmax.f32 %v370, %v371
      %v373 = vrot.slane %v372, 2
      %v374 = vmax.f32 %v372, %v373
      %v375 = vrot.slane %v374, 1
      %v376 = vmax.f32 %v374, %v375
      %v377 = vsel %vm360, %v354, -inf
      %v378 = vmax.f32 %v346, %v377
      %v379 = vrot.slane %v378, 4
      %v380 = vmax.f32 %v378, %v379
      %v381 = vrot.slane %v380, 2
      %v382 = vmax.f32 %v380, %v381
      %v383 = vrot.slane %v382, 1
      %v384 = vmax.f32 %v382, %v383
      %v385 = vsel %vm360, %v355, -inf
      %v386 = vmax.f32 %v347, %v385
      %v387 = vrot.slane %v386, 4
      %v388 = vmax.f32 %v386, %v387
      %v389 = vrot.slane %v388, 2
      %v390 = vmax.f32 %v388, %v389
      %v391 = vrot.slane %v390, 1
      %v392 = vmax.f32 %v390, %v391
      %v393 = vsel %vm360, %v356, -inf
      %v394 = vmax.f32 %v348, %v393
      %v395 = vrot.slane %v394, 4
      %v396 = vmax.f32 %v394, %v395
      %v397 = vrot.slane %v396, 2
      %v398 = vmax.f32 %v396, %v397
      %v399 = vrot.slane %v398, 1
      %v400 = vmax.f32 %v398, %v399
      %v401 = vsel %vm360, %v357, -inf
      %v402 = vmax.f32 %v349, %v401
      %v403 = vrot.slane %v402, 4
      %v404 = vmax.f32 %v402, %v403
      %v405 = vrot.slane %v404, 2
      %v406 = vmax.f32 %v404, %v405
      %v407 = vrot.slane %v406, 1
      %v408 = vmax.f32 %v406, %v407
      %v409 = vsel %vm360, %v358, -inf
      %v410 = vmax.f32 %v350, %v409
      %v411 = vrot.slane %v410, 4
      %v412 = vmax.f32 %v410, %v411
      %v413 = vrot.slane %v412, 2
      %v414 = vmax.f32 %v412, %v413
      %v415 = vrot.slane %v414, 1
      %v416 = vmax.f32 %v414, %v415
      %v417 = vsel %vm360, %v359, -inf
      %v418 = vmax.f32 %v351, %v417
      %v419 = vrot.slane %v418, 4
      %v420 = vmax.f32 %v418, %v419
      %v421 = vrot.slane %v420, 2
      %v422 = vmax.f32 %v420, %v421
      %v423 = vrot.slane %v422, 1
      %v424 = vmax.f32 %v422, %v423
      %v425 = vsub.f32 %v344, %v368
      %v426 = vsub.f32 %v345, %v376
      %v427 = vsub.f32 %v346, %v384
      %v428 = vsub.f32 %v347, %v392
      %v429 = vsub.f32 %v348, %v400
      %v430 = vsub.f32 %v349, %v408
      %v431 = vsub.f32 %v350, %v416
      %v432 = vsub.f32 %v351, %v424
      %v433 = vsub.f32 %v352, %v368
      %v434 = vsub.f32 %v353, %v376
      %v435 = vsub.f32 %v354, %v384
      %v436 = vsub.f32 %v355, %v392
      %v437 = vsub.f32 %v356, %v400
      %v438 = vsub.f32 %v357, %v408
      %v439 = vsub.f32 %v358, %v416
      %v440 = vsub.f32 %v359, %v424
      %v441 = vmul.f32 %v425, 1.442695
      %v442 = vpow.pop %v441
      %v443 = vmul.f32 %v426, 1.442695
      %v444 = vpow.pop %v443
      %v445 = vmul.f32 %v427, 1.442695
      %v446 = vpow.pop %v445
      %v447 = vmul.f32 %v428, 1.442695
      %v448 = vpow.pop %v447
      %v449 = vmul.f32 %v429, 1.442695
      %v450 = vpow.pop %v449
      %v451 = vmul.f32 %v430, 1.442695
      %v452 = vpow.pop %v451
      %v453 = vmul.f32 %v431, 1.442695
      %v454 = vpow.pop %v453
      %v455 = vmul.f32 %v432, 1.442695
      %v456 = vpow.pop %v455
      %v457 = vmul.f32 %v433, 1.442695
      %v458 = vpow.pop %v457
      %v459 = vmul.f32 %v434, 1.442695
      %v460 = vpow.pop %v459
      %v461 = vmul.f32 %v435, 1.442695
      %v462 = vpow.pop %v461
      %v463 = vmul.f32 %v436, 1.442695
      %v464 = vpow.pop %v463
      %v465 = vmul.f32 %v437, 1.442695
      %v466 = vpow.pop %v465
      %v467 = vmul.f32 %v438, 1.442695
      %v468 = vpow.pop %v467
      %v469 = vmul.f32 %v439, 1.442695
      %v470 = vpow.pop %v469
      %v471 = vmul.f32 %v440, 1.442695
      %v472 = vpow.pop %v471
      %v473 = vsel %vm360, %v458, 0.0
      %v474 = vadd.f32 %v442, %v473
      %v475 = vrot.slane %v474, 4
      %v476 = vadd.f32 %v474, %v475
      %v477 = vrot.slane %v476, 2
      %v478 = vadd.f32 %v476, %v477
      %v479 = vrot.slane %v478, 1
      %v480 = vadd.f32 %v478, %v479
      %v481 = vsel %vm360, %v460, 0.0
      %v482 = vadd.f32 %v444, %v481
      %v483 = vrot.slane %v482, 4
      %v484 = vadd.f32 %v482, %v483
      %v485 = vrot.slane %v484, 2
      %v486 = vadd.f32 %v484, %v485
      %v487 = vrot.slane %v486, 1
      %v488 = vadd.f32 %v486, %v487
      %v489 = vsel %vm360, %v462, 0.0
      %v490 = vadd.f32 %v446, %v489
      %v491 = vrot.slane %v490, 4
      %v492 = vadd.f32 %v490, %v491
      %v493 = vrot.slane %v492, 2
      %v494 = vadd.f32 %v492, %v493
      %v495 = vrot.slane %v494, 1
      %v496 = vadd.f32 %v494, %v495
      %v497 = vsel %vm360, %v464, 0.0
      %v498 = vadd.f32 %v448, %v497
      %v499 = vrot.slane %v498, 4
      %v500 = vadd.f32 %v498, %v499
      %v501 = vrot.slane %v500, 2
      %v502 = vadd.f32 %v500, %v501
      %v503 = vrot.slane %v502, 1
      %v504 = vadd.f32 %v502, %v503
      %v505 = vsel %vm360, %v466, 0.0
      %v506 = vadd.f32 %v450, %v505
      %v507 = vrot.slane %v506, 4
      %v508 = vadd.f32 %v506, %v507
      %v509 = vrot.slane %v508, 2
      %v510 = vadd.f32 %v508, %v509
      %v511 = vrot.slane %v510, 1
      %v512 = vadd.f32 %v510, %v511
      %v513 = vsel %vm360, %v468, 0.0
      %v514 = vadd.f32 %v452, %v513
      %v515 = vrot.slane %v514, 4
      %v516 = vadd.f32 %v514, %v515
      %v517 = vrot.slane %v516, 2
      %v518 = vadd.f32 %v516, %v517
      %v519 = vrot.slane %v518, 1
      %v520 = vadd.f32 %v518, %v519
      %v521 = vsel %vm360, %v470, 0.0
      %v522 = vadd.f32 %v454, %v521
      %v523 = vrot.slane %v522, 4
      %v524 = vadd.f32 %v522, %v523
      %v525 = vrot.slane %v524, 2
      %v526 = vadd.f32 %v524, %v525
      %v527 = vrot.slane %v526, 1
      %v528 = vadd.f32 %v526, %v527
      %v529 = vsel %vm360, %v472, 0.0
      %v530 = vadd.f32 %v456, %v529
      %v531 = vrot.slane %v530, 4
      %v532 = vadd.f32 %v530, %v531
      %v533 = vrot.slane %v532, 2
      %v534 = vadd.f32 %v532, %v533
      %v535 = vrot.slane %v534, 1
      %v536 = vadd.f32 %v534, %v535
      %v537 = vlog2.pop %v480
      %v538 = vmul.f32 %v537, 0.6931472
      %v539 = vlog2.pop %v488
      %v540 = vmul.f32 %v539, 0.6931472
      %v541 = vlog2.pop %v496
      %v542 = vmul.f32 %v541, 0.6931472
      %v543 = vlog2.pop %v504
      %v544 = vmul.f32 %v543, 0.6931472
      %v545 = vlog2.pop %v512
      %v546 = vmul.f32 %v545, 0.6931472
      %v547 = vlog2.pop %v520
      %v548 = vmul.f32 %v547, 0.6931472
      %v549 = vlog2.pop %v528
      %v550 = vmul.f32 %v549, 0.6931472
      %v551 = vlog2.pop %v536
      %v552 = vmul.f32 %v551, 0.6931472
      %v553 = vadd.f32 %v368, %v538
      %v554 = vadd.f32 %v376, %v540
      %v555 = vadd.f32 %v384, %v542
      %v556 = vadd.f32 %v392, %v544
      %v557 = vadd.f32 %v400, %v546
      %v558 = vadd.f32 %v408, %v548
      %v559 = vadd.f32 %v416, %v550
      %v560 = vadd.f32 %v424, %v552
      %v561 = vlaneseq
      %v562 = vshrl.u32 %v561, 7
      %v563 = vadd.s32 %v562, 8
      %v564 = vlaneseq
      %v565 = vshrl.u32 %v564, 7
      %v566 = vsub.s32 0, %v565
      %v567 = vrot.slane %v343, %v566
      %v568 = vlaneseq
      %v569 = vshrl.u32 %v568, 7
      %v570 = vsub.s32 1, %v569
      %v571 = vrot.slane %v343, %v570
      %v572 = vlaneseq
      %v573 = vshrl.u32 %v572, 7
      %v574 = vsub.s32 2, %v573
      %v575 = vrot.slane %v343, %v574
      %v576 = vlaneseq
      %v577 = vshrl.u32 %v576, 7
      %v578 = vsub.s32 3, %v577
      %v579 = vrot.slane %v343, %v578
      %v580 = vlaneseq
      %v581 = vshrl.u32 %v580, 7
      %v582 = vsub.s32 4, %v581
      %v583 = vrot.slane %v343, %v582
      %v584 = vlaneseq
      %v585 = vshrl.u32 %v584, 7
      %v586 = vsub.s32 5, %v585
      %v587 = vrot.slane %v343, %v586
      %v588 = vlaneseq
      %v589 = vshrl.u32 %v588, 7
      %v590 = vsub.s32 6, %v589
      %v591 = vrot.slane %v343, %v590
      %v592 = vlaneseq
      %v593 = vshrl.u32 %v592, 7
      %v594 = vsub.s32 7, %v593
      %v595 = vrot.slane %v343, %v594
      %vm596 = vcmp.eq.s32.totalorder %v562, %v567
      %vm597 = vcmp.eq.s32.totalorder %v562, %v571
      %vm598 = vcmp.eq.s32.totalorder %v562, %v575
      %vm599 = vcmp.eq.s32.totalorder %v562, %v579
      %vm600 = vcmp.eq.s32.totalorder %v562, %v583
      %vm601 = vcmp.eq.s32.totalorder %v562, %v587
      %vm602 = vcmp.eq.s32.totalorder %v562, %v591
      %vm603 = vcmp.eq.s32.totalorder %v562, %v595
      %vm604 = vcmp.eq.s32.totalorder %v563, %v567
      %vm605 = vcmp.eq.s32.totalorder %v563, %v571
      %vm606 = vcmp.eq.s32.totalorder %v563, %v575
      %vm607 = vcmp.eq.s32.totalorder %v563, %v579
      %vm608 = vcmp.eq.s32.totalorder %v563, %v583
      %vm609 = vcmp.eq.s32.totalorder %v563, %v587
      %vm610 = vcmp.eq.s32.totalorder %v563, %v591
      %vm611 = vcmp.eq.s32.totalorder %v563, %v595
      %v612 = vsel %vm596, %v344, 0.0
      %v613 = vsel %vm597, %v345, 0.0
      %v614 = vsel %vm598, %v346, 0.0
      %v615 = vsel %vm599, %v347, 0.0
      %v616 = vsel %vm600, %v348, 0.0
      %v617 = vsel %vm601, %v349, 0.0
      %v618 = vsel %vm602, %v350, 0.0
      %v619 = vsel %vm603, %v351, 0.0
      %v620 = vsel %vm604, %v352, 0.0
      %v621 = vsel %vm605, %v353, 0.0
      %v622 = vsel %vm606, %v354, 0.0
      %v623 = vsel %vm607, %v355, 0.0
      %v624 = vsel %vm608, %v356, 0.0
      %v625 = vsel %vm609, %v357, 0.0
      %v626 = vsel %vm610, %v358, 0.0
      %v627 = vsel %vm611, %v359, 0.0
      %v628 = vsel %vm360, %v620, 0.0
      %v629 = vadd.f32 %v612, %v628
      %v630 = vrot.slane %v629, 4
      %v631 = vadd.f32 %v629, %v630
      %v632 = vrot.slane %v631, 2
      %v633 = vadd.f32 %v631, %v632
      %v634 = vrot.slane %v633, 1
      %v635 = vadd.f32 %v633, %v634
      %v636 = vsel %vm360, %v621, 0.0
      %v637 = vadd.f32 %v613, %v636
      %v638 = vrot.slane %v637, 4
      %v639 = vadd.f32 %v637, %v638
      %v640 = vrot.slane %v639, 2
      %v641 = vadd.f32 %v639, %v640
      %v642 = vrot.slane %v641, 1
      %v643 = vadd.f32 %v641, %v642
      %v644 = vsel %vm360, %v622, 0.0
      %v645 = vadd.f32 %v614, %v644
      %v646 = vrot.slane %v645, 4
      %v647 = vadd.f32 %v645, %v646
      %v648 = vrot.slane %v647, 2
      %v649 = vadd.f32 %v647, %v648
      %v650 = vrot.slane %v649, 1
      %v651 = vadd.f32 %v649, %v650
      %v652 = vsel %vm360, %v623, 0.0
      %v653 = vadd.f32 %v615, %v652
      %v654 = vrot.slane %v653, 4
      %v655 = vadd.f32 %v653, %v654
      %v656 = vrot.slane %v655, 2
      %v657 = vadd.f32 %v655, %v656
      %v658 = vrot.slane %v657, 1
      %v659 = vadd.f32 %v657, %v658
      %v660 = vsel %vm360, %v624, 0.0
      %v661 = vadd.f32 %v616, %v660
      %v662 = vrot.slane %v661, 4
      %v663 = vadd.f32 %v661, %v662
      %v664 = vrot.slane %v663, 2
      %v665 = vadd.f32 %v663, %v664
      %v666 = vrot.slane %v665, 1
      %v667 = vadd.f32 %v665, %v666
      %v668 = vsel %vm360, %v625, 0.0
      %v669 = vadd.f32 %v617, %v668
      %v670 = vrot.slane %v669, 4
      %v671 = vadd.f32 %v669, %v670
      %v672 = vrot.slane %v671, 2
      %v673 = vadd.f32 %v671, %v672
      %v674 = vrot.slane %v673, 1
      %v675 = vadd.f32 %v673, %v674
      %v676 = vsel %vm360, %v626, 0.0
      %v677 = vadd.f32 %v618, %v676
      %v678 = vrot.slane %v677, 4
      %v679 = vadd.f32 %v677, %v678
      %v680 = vrot.slane %v679, 2
      %v681 = vadd.f32 %v679, %v680
      %v682 = vrot.slane %v681, 1
      %v683 = vadd.f32 %v681, %v682
      %v684 = vsel %vm360, %v627, 0.0
      %v685 = vadd.f32 %v619, %v684
      %v686 = vrot.slane %v685, 4
      %v687 = vadd.f32 %v685, %v686
      %v688 = vrot.slane %v687, 2
      %v689 = vadd.f32 %v687, %v688
      %v690 = vrot.slane %v689, 1
      %v691 = vadd.f32 %v689, %v690
      %v692 = vsub.f32 %v553, %v635
      %v693 = vsub.f32 %v554, %v643
      %v694 = vsub.f32 %v555, %v651
      %v695 = vsub.f32 %v556, %v659
      %v696 = vsub.f32 %v557, %v667
      %v697 = vsub.f32 %v558, %v675
      %v698 = vsub.f32 %v559, %v683
      %v699 = vsub.f32 %v560, %v691
      %v700 = vrcp.pop %v480
      %v701 = vrcp.pop %v488
      %v702 = vrcp.pop %v496
      %v703 = vrcp.pop %v504
      %v704 = vrcp.pop %v512
      %v705 = vrcp.pop %v520
      %v706 = vrcp.pop %v528
      %v707 = vrcp.pop %v536
      %v708 = vsub.f32 1.0, %v700
      %v709 = vsub.f32 1.0, %v701
      %v710 = vsub.f32 1.0, %v702
      %v711 = vsub.f32 1.0, %v703
      %v712 = vsub.f32 1.0, %v704
      %v713 = vsub.f32 1.0, %v705
      %v714 = vsub.f32 1.0, %v706
      %v715 = vsub.f32 1.0, %v707
      %v716 = vmax.f32 %v708, 0.0
      %v717 = vmax.f32 %v709, 0.0
      %v718 = vmax.f32 %v710, 0.0
      %v719 = vmax.f32 %v711, 0.0
      %v720 = vmax.f32 %v712, 0.0
      %v721 = vmax.f32 %v713, 0.0
      %v722 = vmax.f32 %v714, 0.0
      %v723 = vmax.f32 %v715, 0.0
      %v724 = vmul.f32 %v716, %v716
      %v725 = vmul.f32 %v717, %v717
      %v726 = vmul.f32 %v718, %v718
      %v727 = vmul.f32 %v719, %v719
      %v728 = vmul.f32 %v720, %v720
      %v729 = vmul.f32 %v721, %v721
      %v730 = vmul.f32 %v722, %v722
      %v731 = vmul.f32 %v723, %v723
      %v732 = vmul.f32 %v692, %v724
      %v733 = vmul.f32 %v693, %v725
      %v734 = vmul.f32 %v694, %v726
      %v735 = vmul.f32 %v695, %v727
      %v736 = vmul.f32 %v696, %v728
      %v737 = vmul.f32 %v697, %v729
      %v738 = vmul.f32 %v698, %v730
      %v739 = vmul.f32 %v699, %v731
      %v740 = vld [vmem:[%s293] sm:$0xff]
      %v741 = vld [vmem:[%s293 + $0x8] sm:$0xff]
      %v742 = vld [vmem:[%s293 + $0x10] sm:$0xff]
      %v743 = vld [vmem:[%s293 + $0x18] sm:$0xff]
      %v744 = vld [vmem:[%s293 + $0x20] sm:$0xff]
      %v745 = vld [vmem:[%s293 + $0x28] sm:$0xff]
      %v746 = vld [vmem:[%s293 + $0x30] sm:$0xff]
      %v747 = vld [vmem:[%s293 + $0x38] sm:$0xff]
      %v748 = vld [vmem:[%s293 + $0x40] sm:$0x3f]
      %v749 = vld [vmem:[%s293 + $0x48] sm:$0x3f]
      %v750 = vld [vmem:[%s293 + $0x50] sm:$0x3f]
      %v751 = vld [vmem:[%s293 + $0x58] sm:$0x3f]
      %v752 = vld [vmem:[%s293 + $0x60] sm:$0x3f]
      %v753 = vld [vmem:[%s293 + $0x68] sm:$0x3f]
      %v754 = vld [vmem:[%s293 + $0x70] sm:$0x3f]
      %v755 = vld [vmem:[%s293 + $0x78] sm:$0x3f]
      %v756 = vsel %vm360, %v748, -inf
      %v757 = vmax.f32 %v740, %v756
      %v758 = vrot.slane %v757, 4
      %v759 = vmax.f32 %v757, %v758
      %v760 = vrot.slane %v759, 2
      %v761 = vmax.f32 %v759, %v760
      %v762 = vrot.slane %v761, 1
      %v763 = vmax.f32 %v761, %v762
      %v764 = vsel %vm360, %v749, -inf
      %v765 = vmax.f32 %v741, %v764
      %v766 = vrot.slane %v765, 4
      %v767 = vmax.f32 %v765, %v766
      %v768 = vrot.slane %v767, 2
      %v769 = vmax.f32 %v767, %v768
      %v770 = vrot.slane %v769, 1
      %v771 = vmax.f32 %v769, %v770
      %v772 = vsel %vm360, %v750, -inf
      %v773 = vmax.f32 %v742, %v772
      %v774 = vrot.slane %v773, 4
      %v775 = vmax.f32 %v773, %v774
      %v776 = vrot.slane %v775, 2
      %v777 = vmax.f32 %v775, %v776
      %v778 = vrot.slane %v777, 1
      %v779 = vmax.f32 %v777, %v778
      %v780 = vsel %vm360, %v751, -inf
      %v781 = vmax.f32 %v743, %v780
      %v782 = vrot.slane %v781, 4
      %v783 = vmax.f32 %v781, %v782
      %v784 = vrot.slane %v783, 2
      %v785 = vmax.f32 %v783, %v784
      %v786 = vrot.slane %v785, 1
      %v787 = vmax.f32 %v785, %v786
      %v788 = vsel %vm360, %v752, -inf
      %v789 = vmax.f32 %v744, %v788
      %v790 = vrot.slane %v789, 4
      %v791 = vmax.f32 %v789, %v790
      %v792 = vrot.slane %v791, 2
      %v793 = vmax.f32 %v791, %v792
      %v794 = vrot.slane %v793, 1
      %v795 = vmax.f32 %v793, %v794
      %v796 = vsel %vm360, %v753, -inf
      %v797 = vmax.f32 %v745, %v796
      %v798 = vrot.slane %v797, 4
      %v799 = vmax.f32 %v797, %v798
      %v800 = vrot.slane %v799, 2
      %v801 = vmax.f32 %v799, %v800
      %v802 = vrot.slane %v801, 1
      %v803 = vmax.f32 %v801, %v802
      %v804 = vsel %vm360, %v754, -inf
      %v805 = vmax.f32 %v746, %v804
      %v806 = vrot.slane %v805, 4
      %v807 = vmax.f32 %v805, %v806
      %v808 = vrot.slane %v807, 2
      %v809 = vmax.f32 %v807, %v808
      %v810 = vrot.slane %v809, 1
      %v811 = vmax.f32 %v809, %v810
      %v812 = vsel %vm360, %v755, -inf
      %v813 = vmax.f32 %v747, %v812
      %v814 = vrot.slane %v813, 4
      %v815 = vmax.f32 %v813, %v814
      %v816 = vrot.slane %v815, 2
      %v817 = vmax.f32 %v815, %v816
      %v818 = vrot.slane %v817, 1
      %v819 = vmax.f32 %v817, %v818
      %v820 = vsub.f32 %v740, %v763
      %v821 = vsub.f32 %v741, %v771
      %v822 = vsub.f32 %v742, %v779
      %v823 = vsub.f32 %v743, %v787
      %v824 = vsub.f32 %v744, %v795
      %v825 = vsub.f32 %v745, %v803
      %v826 = vsub.f32 %v746, %v811
      %v827 = vsub.f32 %v747, %v819
      %v828 = vsub.f32 %v748, %v763
      %v829 = vsub.f32 %v749, %v771
      %v830 = vsub.f32 %v750, %v779
      %v831 = vsub.f32 %v751, %v787
      %v832 = vsub.f32 %v752, %v795
      %v833 = vsub.f32 %v753, %v803
      %v834 = vsub.f32 %v754, %v811
      %v835 = vsub.f32 %v755, %v819
      %v836 = vmul.f32 %v820, 1.442695
      %v837 = vpow.pop %v836
      %v838 = vmul.f32 %v821, 1.442695
      %v839 = vpow.pop %v838
      %v840 = vmul.f32 %v822, 1.442695
      %v841 = vpow.pop %v840
      %v842 = vmul.f32 %v823, 1.442695
      %v843 = vpow.pop %v842
      %v844 = vmul.f32 %v824, 1.442695
      %v845 = vpow.pop %v844
      %v846 = vmul.f32 %v825, 1.442695
      %v847 = vpow.pop %v846
      %v848 = vmul.f32 %v826, 1.442695
      %v849 = vpow.pop %v848
      %v850 = vmul.f32 %v827, 1.442695
      %v851 = vpow.pop %v850
      %v852 = vmul.f32 %v828, 1.442695
      %v853 = vpow.pop %v852
      %v854 = vmul.f32 %v829, 1.442695
      %v855 = vpow.pop %v854
      %v856 = vmul.f32 %v830, 1.442695
      %v857 = vpow.pop %v856
      %v858 = vmul.f32 %v831, 1.442695
      %v859 = vpow.pop %v858
      %v860 = vmul.f32 %v832, 1.442695
      %v861 = vpow.pop %v860
      %v862 = vmul.f32 %v833, 1.442695
      %v863 = vpow.pop %v862
      %v864 = vmul.f32 %v834, 1.442695
      %v865 = vpow.pop %v864
      %v866 = vmul.f32 %v835, 1.442695
      %v867 = vpow.pop %v866
      %v868 = vsel %vm360, %v853, 0.0
      %v869 = vadd.f32 %v837, %v868
      %v870 = vrot.slane %v869, 4
      %v871 = vadd.f32 %v869, %v870
      %v872 = vrot.slane %v871, 2
      %v873 = vadd.f32 %v871, %v872
      %v874 = vrot.slane %v873, 1
      %v875 = vadd.f32 %v873, %v874
      %v876 = vsel %vm360, %v855, 0.0
      %v877 = vadd.f32 %v839, %v876
      %v878 = vrot.slane %v877, 4
      %v879 = vadd.f32 %v877, %v878
      %v880 = vrot.slane %v879, 2
      %v881 = vadd.f32 %v879, %v880
      %v882 = vrot.slane %v881, 1
      %v883 = vadd.f32 %v881, %v882
      %v884 = vsel %vm360, %v857, 0.0
      %v885 = vadd.f32 %v841, %v884
      %v886 = vrot.slane %v885, 4
      %v887 = vadd.f32 %v885, %v886
      %v888 = vrot.slane %v887, 2
      %v889 = vadd.f32 %v887, %v888
      %v890 = vrot.slane %v889, 1
      %v891 = vadd.f32 %v889, %v890
      %v892 = vsel %vm360, %v859, 0.0
      %v893 = vadd.f32 %v843, %v892
      %v894 = vrot.slane %v893, 4
      %v895 = vadd.f32 %v893, %v894
      %v896 = vrot.slane %v895, 2
      %v897 = vadd.f32 %v895, %v896
      %v898 = vrot.slane %v897, 1
      %v899 = vadd.f32 %v897, %v898
      %v900 = vsel %vm360, %v861, 0.0
      %v901 = vadd.f32 %v845, %v900
      %v902 = vrot.slane %v901, 4
      %v903 = vadd.f32 %v901, %v902
      %v904 = vrot.slane %v903, 2
      %v905 = vadd.f32 %v903, %v904
      %v906 = vrot.slane %v905, 1
      %v907 = vadd.f32 %v905, %v906
      %v908 = vsel %vm360, %v863, 0.0
      %v909 = vadd.f32 %v847, %v908
      %v910 = vrot.slane %v909, 4
      %v911 = vadd.f32 %v909, %v910
      %v912 = vrot.slane %v911, 2
      %v913 = vadd.f32 %v911, %v912
      %v914 = vrot.slane %v913, 1
      %v915 = vadd.f32 %v913, %v914
      %v916 = vsel %vm360, %v865, 0.0
      %v917 = vadd.f32 %v849, %v916
      %v918 = vrot.slane %v917, 4
      %v919 = vadd.f32 %v917, %v918
      %v920 = vrot.slane %v919, 2
      %v921 = vadd.f32 %v919, %v920
      %v922 = vrot.slane %v921, 1
      %v923 = vadd.f32 %v921, %v922
      %v924 = vsel %vm360, %v867, 0.0
      %v925 = vadd.f32 %v851, %v924
      %v926 = vrot.slane %v925, 4
      %v927 = vadd.f32 %v925, %v926
      %v928 = vrot.slane %v927, 2
      %v929 = vadd.f32 %v927, %v928
      %v930 = vrot.slane %v929, 1
      %v931 = vadd.f32 %v929, %v930
      %v932 = vlog2.pop %v875
      %v933 = vmul.f32 %v932, 0.6931472
      %v934 = vlog2.pop %v883
      %v935 = vmul.f32 %v934, 0.6931472
      %v936 = vlog2.pop %v891
      %v937 = vmul.f32 %v936, 0.6931472
      %v938 = vlog2.pop %v899
      %v939 = vmul.f32 %v938, 0.6931472
      %v940 = vlog2.pop %v907
      %v941 = vmul.f32 %v940, 0.6931472
      %v942 = vlog2.pop %v915
      %v943 = vmul.f32 %v942, 0.6931472
      %v944 = vlog2.pop %v923
      %v945 = vmul.f32 %v944, 0.6931472
      %v946 = vlog2.pop %v931
      %v947 = vmul.f32 %v946, 0.6931472
      %v948 = vadd.f32 %v763, %v933
      %v949 = vadd.f32 %v771, %v935
      %v950 = vadd.f32 %v779, %v937
      %v951 = vadd.f32 %v787, %v939
      %v952 = vadd.f32 %v795, %v941
      %v953 = vadd.f32 %v803, %v943
      %v954 = vadd.f32 %v811, %v945
      %v955 = vadd.f32 %v819, %v947
      %v956 = vsel %vm596, %v740, 0.0
      %v957 = vsel %vm597, %v741, 0.0
      %v958 = vsel %vm598, %v742, 0.0
      %v959 = vsel %vm599, %v743, 0.0
      %v960 = vsel %vm600, %v744, 0.0
      %v961 = vsel %vm601, %v745, 0.0
      %v962 = vsel %vm602, %v746, 0.0
      %v963 = vsel %vm603, %v747, 0.0
      %v964 = vsel %vm604, %v748, 0.0
      %v965 = vsel %vm605, %v749, 0.0
      %v966 = vsel %vm606, %v750, 0.0
      %v967 = vsel %vm607, %v751, 0.0
      %v968 = vsel %vm608, %v752, 0.0
      %v969 = vsel %vm609, %v753, 0.0
      %v970 = vsel %vm610, %v754, 0.0
      %v971 = vsel %vm611, %v755, 0.0
      %v972 = vsel %vm360, %v964, 0.0
      %v973 = vadd.f32 %v956, %v972
      %v974 = vrot.slane %v973, 4
      %v975 = vadd.f32 %v973, %v974
      %v976 = vrot.slane %v975, 2
      %v977 = vadd.f32 %v975, %v976
      %v978 = vrot.slane %v977, 1
      %v979 = vadd.f32 %v977, %v978
      %v980 = vsel %vm360, %v965, 0.0
      %v981 = vadd.f32 %v957, %v980
      %v982 = vrot.slane %v981, 4
      %v983 = vadd.f32 %v981, %v982
      %v984 = vrot.slane %v983, 2
      %v985 = vadd.f32 %v983, %v984
      %v986 = vrot.slane %v985, 1
      %v987 = vadd.f32 %v985, %v986
      %v988 = vsel %vm360, %v966, 0.0
      %v989 = vadd.f32 %v958, %v988
      %v990 = vrot.slane %v989, 4
      %v991 = vadd.f32 %v989, %v990
      %v992 = vrot.slane %v991, 2
      %v993 = vadd.f32 %v991, %v992
      %v994 = vrot.slane %v993, 1
      %v995 = vadd.f32 %v993, %v994
      %v996 = vsel %vm360, %v967, 0.0
      %v997 = vadd.f32 %v959, %v996
      %v998 = vrot.slane %v997, 4
      %v999 = vadd.f32 %v997, %v998
      %v1000 = vrot.slane %v999, 2
      %v1001 = vadd.f32 %v999, %v1000
      %v1002 = vrot.slane %v1001, 1
      %v1003 = vadd.f32 %v1001, %v1002
      %v1004 = vsel %vm360, %v968, 0.0
      %v1005 = vadd.f32 %v960, %v1004
      %v1006 = vrot.slane %v1005, 4
      %v1007 = vadd.f32 %v1005, %v1006
      %v1008 = vrot.slane %v1007, 2
      %v1009 = vadd.f32 %v1007, %v1008
      %v1010 = vrot.slane %v1009, 1
      %v1011 = vadd.f32 %v1009, %v1010
      %v1012 = vsel %vm360, %v969, 0.0
      %v1013 = vadd.f32 %v961, %v1012
      %v1014 = vrot.slane %v1013, 4
      %v1015 = vadd.f32 %v1013, %v1014
      %v1016 = vrot.slane %v1015, 2
      %v1017 = vadd.f32 %v1015, %v1016
      %v1018 = vrot.slane %v1017, 1
      %v1019 = vadd.f32 %v1017, %v1018
      %v1020 = vsel %vm360, %v970, 0.0
      %v1021 = vadd.f32 %v962, %v1020
      %v1022 = vrot.slane %v1021, 4
      %v1023 = vadd.f32 %v1021, %v1022
      %v1024 = vrot.slane %v1023, 2
      %v1025 = vadd.f32 %v1023, %v1024
      %v1026 = vrot.slane %v1025, 1
      %v1027 = vadd.f32 %v1025, %v1026
      %v1028 = vsel %vm360, %v971, 0.0
      %v1029 = vadd.f32 %v963, %v1028
      %v1030 = vrot.slane %v1029, 4
      %v1031 = vadd.f32 %v1029, %v1030
      %v1032 = vrot.slane %v1031, 2
      %v1033 = vadd.f32 %v1031, %v1032
      %v1034 = vrot.slane %v1033, 1
      %v1035 = vadd.f32 %v1033, %v1034
      %v1036 = vsub.f32 %v948, %v979
      %v1037 = vsub.f32 %v949, %v987
      %v1038 = vsub.f32 %v950, %v995
      %v1039 = vsub.f32 %v951, %v1003
      %v1040 = vsub.f32 %v952, %v1011
      %v1041 = vsub.f32 %v953, %v1019
      %v1042 = vsub.f32 %v954, %v1027
      %v1043 = vsub.f32 %v955, %v1035
      %v1044 = vrcp.pop %v875
      %v1045 = vrcp.pop %v883
      %v1046 = vrcp.pop %v891
      %v1047 = vrcp.pop %v899
      %v1048 = vrcp.pop %v907
      %v1049 = vrcp.pop %v915
      %v1050 = vrcp.pop %v923
      %v1051 = vrcp.pop %v931
      %v1052 = vsub.f32 1.0, %v1044
      %v1053 = vsub.f32 1.0, %v1045
      %v1054 = vsub.f32 1.0, %v1046
      %v1055 = vsub.f32 1.0, %v1047
      %v1056 = vsub.f32 1.0, %v1048
      %v1057 = vsub.f32 1.0, %v1049
      %v1058 = vsub.f32 1.0, %v1050
      %v1059 = vsub.f32 1.0, %v1051
      %v1060 = vmax.f32 %v1052, 0.0
      %v1061 = vmax.f32 %v1053, 0.0
      %v1062 = vmax.f32 %v1054, 0.0
      %v1063 = vmax.f32 %v1055, 0.0
      %v1064 = vmax.f32 %v1056, 0.0
      %v1065 = vmax.f32 %v1057, 0.0
      %v1066 = vmax.f32 %v1058, 0.0
      %v1067 = vmax.f32 %v1059, 0.0
      %v1068 = vmul.f32 %v1060, %v1060
      %v1069 = vmul.f32 %v1061, %v1061
      %v1070 = vmul.f32 %v1062, %v1062
      %v1071 = vmul.f32 %v1063, %v1063
      %v1072 = vmul.f32 %v1064, %v1064
      %v1073 = vmul.f32 %v1065, %v1065
      %v1074 = vmul.f32 %v1066, %v1066
      %v1075 = vmul.f32 %v1067, %v1067
      %v1076 = vmul.f32 %v1036, %v1068
      %v1077 = vmul.f32 %v1037, %v1069
      %v1078 = vmul.f32 %v1038, %v1070
      %v1079 = vmul.f32 %v1039, %v1071
      %v1080 = vmul.f32 %v1040, %v1072
      %v1081 = vmul.f32 %v1041, %v1073
      %v1082 = vmul.f32 %v1042, %v1074
      %v1083 = vmul.f32 %v1043, %v1075
      %v1084 = vadd.f32 %v732, %v1076
      %v1085 = vadd.f32 %v733, %v1077
      %v1086 = vadd.f32 %v734, %v1078
      %v1087 = vadd.f32 %v735, %v1079
      %v1088 = vadd.f32 %v736, %v1080
      %v1089 = vadd.f32 %v737, %v1081
      %v1090 = vadd.f32 %v738, %v1082
      %v1091 = vadd.f32 %v739, %v1083
      %v1092 = vsel %vm335, %v1084, 0.0
      %v1093 = vsel %vm336, %v1085, 0.0
      %v1094 = vsel %vm337, %v1086, 0.0
      %v1095 = vsel %vm338, %v1087, 0.0
      %v1096 = vsel %vm339, %v1088, 0.0
      %v1097 = vsel %vm340, %v1089, 0.0
      %v1098 = vsel %vm341, %v1090, 0.0
      %v1099 = vsel %vm342, %v1091, 0.0
      %vm1100 = vcmask 1040384
      %v1101 = vsel %vm1100, %v1092, 0.0
      %v1102 = vsel %vm1100, %v1093, 0.0
      %v1103 = vadd.f32 %v1101, %v1102
      %v1104 = vsel %vm1100, %v1094, 0.0
      %v1105 = vadd.f32 %v1103, %v1104
      %v1106 = vsel %vm1100, %v1095, 0.0
      %v1107 = vadd.f32 %v1105, %v1106
      %v1108 = vsel %vm1100, %v1096, 0.0
      %v1109 = vadd.f32 %v1107, %v1108
      %v1110 = vsel %vm1100, %v1097, 0.0
      %v1111 = vadd.f32 %v1109, %v1110
      %v1112 = vsel %vm1100, %v1098, 0.0
      %v1113 = vadd.f32 %v1111, %v1112
      %v1114 = vsel %vm1100, %v1099, 0.0
      %v1115 = vadd.f32 %v1113, %v1114
      %1116 = vadd.xlane.f32.xlu0 %v1115
      %v1117 = vpop.xlane.xlu0 %1116
      %v1118 = vrot.slane %v1117, 4
      %v1119 = vadd.f32 %v1117, %v1118
      %v1120 = vrot.slane %v1119, 2
      %v1121 = vadd.f32 %v1119, %v1120
      %v1122 = vrot.slane %v1121, 1
      %v1123 = vadd.f32 %v1121, %v1122
      %s1124 = vtos %v1123
      %v1125 = vstv %s1124
      %vm1126 = vcmask 0
      %1127 = vst.msk [vmem:[%s309] sm:$0x1] %vm1126, %v1125
      %vm1128 = vcmp.gt.s32.totalorder %v343, 0
      %v1129 = vsel %vm1128, 1, 0
      %v1130 = vlaneseq
      %v1131 = vshrl.u32 %v1130, 7
      %v1132 = vsub.s32 0, %v1131
      %v1133 = vrot.slane %v1129, %v1132
      %v1134 = vlaneseq
      %v1135 = vshrl.u32 %v1134, 7
      %v1136 = vsub.s32 1, %v1135
      %v1137 = vrot.slane %v1129, %v1136
      %v1138 = vlaneseq
      %v1139 = vshrl.u32 %v1138, 7
      %v1140 = vsub.s32 2, %v1139
      %v1141 = vrot.slane %v1129, %v1140
      %v1142 = vlaneseq
      %v1143 = vshrl.u32 %v1142, 7
      %v1144 = vsub.s32 3, %v1143
      %v1145 = vrot.slane %v1129, %v1144
      %v1146 = vlaneseq
      %v1147 = vshrl.u32 %v1146, 7
      %v1148 = vsub.s32 4, %v1147
      %v1149 = vrot.slane %v1129, %v1148
      %v1150 = vlaneseq
      %v1151 = vshrl.u32 %v1150, 7
      %v1152 = vsub.s32 5, %v1151
      %v1153 = vrot.slane %v1129, %v1152
      %v1154 = vlaneseq
      %v1155 = vshrl.u32 %v1154, 7
      %v1156 = vsub.s32 6, %v1155
      %v1157 = vrot.slane %v1129, %v1156
      %v1158 = vlaneseq
      %v1159 = vshrl.u32 %v1158, 7
      %v1160 = vsub.s32 7, %v1159
      %v1161 = vrot.slane %v1129, %v1160
      %vm1162 = vcmp.ne.s32.totalorder %v1133, 0
      %vm1163 = vcmp.ne.s32.totalorder %v1137, 0
      %vm1164 = vcmp.ne.s32.totalorder %v1141, 0
      %vm1165 = vcmp.ne.s32.totalorder %v1145, 0
      %vm1166 = vcmp.ne.s32.totalorder %v1149, 0
      %vm1167 = vcmp.ne.s32.totalorder %v1153, 0
      %vm1168 = vcmp.ne.s32.totalorder %v1157, 0
      %vm1169 = vcmp.ne.s32.totalorder %v1161, 0
      %vm1170 = vmand %vm335, %vm1162
      %vm1171 = vmand %vm336, %vm1163
      %vm1172 = vmand %vm337, %vm1164
      %vm1173 = vmand %vm338, %vm1165
      %vm1174 = vmand %vm339, %vm1166
      %vm1175 = vmand %vm340, %vm1167
      %vm1176 = vmand %vm341, %vm1168
      %vm1177 = vmand %vm342, %vm1169
      %v1178 = vsel %vm1170, 1.0, 0.0
      %v1179 = vsel %vm1171, 1.0, 0.0
      %v1180 = vsel %vm1172, 1.0, 0.0
      %v1181 = vsel %vm1173, 1.0, 0.0
      %v1182 = vsel %vm1174, 1.0, 0.0
      %v1183 = vsel %vm1175, 1.0, 0.0
      %v1184 = vsel %vm1176, 1.0, 0.0
      %v1185 = vsel %vm1177, 1.0, 0.0
      %v1186 = vsel %vm1100, %v1178, 0.0
      %v1187 = vsel %vm1100, %v1179, 0.0
      %v1188 = vadd.f32 %v1186, %v1187
      %v1189 = vsel %vm1100, %v1180, 0.0
      %v1190 = vadd.f32 %v1188, %v1189
      %v1191 = vsel %vm1100, %v1181, 0.0
      %v1192 = vadd.f32 %v1190, %v1191
      %v1193 = vsel %vm1100, %v1182, 0.0
      %v1194 = vadd.f32 %v1192, %v1193
      %v1195 = vsel %vm1100, %v1183, 0.0
      %v1196 = vadd.f32 %v1194, %v1195
      %v1197 = vsel %vm1100, %v1184, 0.0
      %v1198 = vadd.f32 %v1196, %v1197
      %v1199 = vsel %vm1100, %v1185, 0.0
      %v1200 = vadd.f32 %v1198, %v1199
      %1201 = vadd.xlane.f32.xlu0 %v1200
      %v1202 = vpop.xlane.xlu0 %1201
      %v1203 = vrot.slane %v1202, 4
      %v1204 = vadd.f32 %v1202, %v1203
      %v1205 = vrot.slane %v1204, 2
      %v1206 = vadd.f32 %v1204, %v1205
      %v1207 = vrot.slane %v1206, 1
      %v1208 = vadd.f32 %v1206, %v1207
      %s1209 = vtos %v1208
      %v1210 = vstv %s1209
      %1211 = vst.msk [vmem:[%s315] sm:$0x1] %vm1126, %v1210
      %p1212 = scmp.lt.s32.totalorder %s20, 1
      %s1213 = scalar_select %p1212, %s20, 1
      %p1214 = scmp.lt.s32.totalorder %s21, 0
      %s1215 = scalar_select %p1214, %s21, 0
      %s1216 = sadd.s32 %s1215, %s1213
      %s1217 = scalar_lea.vmem %s3, %s1216
      %p1218 = scmp.lt.s32.totalorder %s20, 1
      %s1219 = scalar_select %p1218, %s20, 1
      %p1220 = scmp.lt.s32.totalorder %s21, 0
      %s1221 = scalar_select %p1220, %s21, 0
      %s1222 = sadd.s32 %s1221, %s1219
      %s1223 = scalar_lea.vmem %s4, %s1222
      // Predicated region
      $region33: #{tpu_custom_call.1} parent=31 // pred_check
        %p1224 = pneg %p132
      $region34: #{tpu_custom_call.1} parent=31 // pred_check_branch
        %1226 = sbr.rel (%p1224) target = $region36
      $region35: #{tpu_custom_call.1} parent=31 // pred_region
        _
      $region36: #{tpu_custom_call.1} parent=31 // pred_fallthru
        _
      // Predicated region
      $region37: #{tpu_custom_call.1} parent=31 // pred_check
        %p1227 = pneg %p160
      $region38: #{tpu_custom_call.1} parent=31 // pred_check_branch
        %1229 = sbr.rel (%p1227) target = $region40
      $region39: #{tpu_custom_call.1} parent=31 // pred_region
        _
      $region40: #{tpu_custom_call.1} parent=31 // pred_fallthru
        _
    $region32: #{tpu_custom_call.1} parent=5 // pred_fallthru
      _
    %p1230 = scmp.le.s32.totalorder 2, %s11
    // Predicated region
    $region41: #{tpu_custom_call.1} parent=5 // pred_check
      %p1231 = pneg %p1230
    $region42: #{tpu_custom_call.1} parent=5 // pred_check_branch
      %1233 = sbr.rel (%p1231) target = $region44
    $region43: #{tpu_custom_call.1} parent=5 // pred_region
      %s1234 = ssub.s32 %s11, 2
      // Predicated region
      $region45: #{tpu_custom_call.1} parent=43 // pred_check
        %p1235 = pneg %p138
      $region46: #{tpu_custom_call.1} parent=43 // pred_check_branch
        %1237 = sbr.rel (%p1235) target = $region48
      $region47: #{tpu_custom_call.1} parent=43 // pred_region
        %p1238 = scmp.lt.s32.totalorder %s22, 1
        %s1239 = scalar_select %p1238, %s22, 1
        %p1240 = scmp.lt.s32.totalorder %s23, 0
        %s1241 = scalar_select %p1240, %s23, 0
        %s1242 = sadd.s32 %s1241, %s1239
        %s1243 = scalar_lea.vmem %s3, %s1242
      $region48: #{tpu_custom_call.1} parent=43 // pred_fallthru
        _
      // Predicated region
      $region49: #{tpu_custom_call.1} parent=43 // pred_check
        %p1244 = pneg %p166
      $region50: #{tpu_custom_call.1} parent=43 // pred_check_branch
        %1246 = sbr.rel (%p1244) target = $region52
      $region51: #{tpu_custom_call.1} parent=43 // pred_region
        %p1247 = scmp.lt.s32.totalorder %s22, 1
        %s1248 = scalar_select %p1247, %s22, 1
        %p1249 = scmp.lt.s32.totalorder %s23, 0
        %s1250 = scalar_select %p1249, %s23, 0
        %s1251 = sadd.s32 %s1250, %s1248
        %s1252 = scalar_lea.vmem %s4, %s1251
      $region52: #{tpu_custom_call.1} parent=43 // pred_fallthru
        _
    $region44: #{tpu_custom_call.1} parent=5 // pred_fallthru
      _
  $region6: #{tpu_custom_call.1} parent=0 // loop_footer
    %s15 = sadd.s32 1, %s11
  $region7: #{tpu_custom_call.1} parent=0 // loop_footer_branch
    %10 = sbr.rel target = $region3
  $region8: #{tpu_custom_call.1} parent=0 // loop_exit
    _

</llo_original>
